<compile_context>
chip_gen: v5e
topology: v5e:2x2
jax: 0.10.0
libtpu: 0.0.40
codegen_flags: <defaults>
</compile_context>

<pallas_src>
import functools

import jax
import jax.numpy as jnp
from jax.experimental import pallas as pl
from jax.experimental.pallas import tpu as pltpu


def _round_up(x, m):
    return (x + m - 1) // m * m


def _dcconv1d_kernel(x0_ref, x1_ref, w0_ref, w1_ref, b_ref, o_ref):
    # x0_ref: (1, C_in, TL)   taps at t
    # x1_ref: (1, C_in, TL)   taps at t + dilation (shift already applied by the DMA/wrapper)
    # w0_ref: (TCO, C_in)  w1_ref: (TCO, C_in)  b_ref: (TCO, 1) f32
    # o_ref : (1, TCO, TL)
    acc = jnp.dot(w0_ref[...], x0_ref[0], preferred_element_type=jnp.float32)
    acc = acc + jnp.dot(w1_ref[...], x1_ref[0], preferred_element_type=jnp.float32)
    acc = acc + b_ref[...]                      # (TCO, 1) broadcasts over TL
    o_ref[0] = acc.astype(o_ref.dtype)


def _choose_tiles(c_in, c_out, l_out, itemsize, vmem_budget_bytes=12 * 1024 * 1024):
    # C_out tile: only tile when large and cleanly divisible (256 matches v6e/v7x MXU
    # width, 128 is safe everywhere).
    tco = c_out
    for cand in (256, 128):
        if c_out > cand and c_out % cand == 0:
            tco = cand
            break
    # Length tile: largest multiple of 128 whose double-buffered working set
    # (x0 + x1 + out blocks, resident weights, f32 intermediates) fits the budget.
    w_bytes = (2 * tco * c_in + tco) * itemsize * 2          # w0, w1, bias (dbl-buffered)
    tl = 2048
    while tl > 128:
        blk = 2 * (2 * c_in + tco) * tl * itemsize           # dbl-buffered x0, x1, out
        interm = 3 * tco * tl * 4                            # f32 accumulators in kernel
        if blk + interm + w_bytes <= vmem_budget_bytes:
            break
        tl //= 2
    tl = min(tl, _round_up(l_out, 128))
    # Rebalance so padding waste is at most one 128-lane group per tile.
    n_l = pl.cdiv(l_out, tl)
    tl = _round_up(pl.cdiv(l_out, n_l), 128)
    return tco, tl, n_l


def dcconv1d(x, weight, bias, dilation, *, compute_dtype=None):
    """Dilated causal conv1d (kernel_size=2, stride=1, padding=0).

    x: (N, C_in, L); weight: (C_out, C_in, 2); bias: (C_out,).
    Returns (N, C_out, L - dilation) in x.dtype.
    """
    n, c_in, length = x.shape
    c_out = weight.shape[0]
    l_out = length - dilation
    assert l_out > 0, "sequence too short for this dilation"

    out_dtype = x.dtype
    cdt = jnp.dtype(compute_dtype) if compute_dtype is not None else jnp.dtype(x.dtype)

    tco, tl, n_l = _choose_tiles(c_in, c_out, l_out, cdt.itemsize)
    l_pad = n_l * tl
    n_co = c_out // tco

    # Wrapper glue (layout plumbing, not compute): split the size-2 kernel axis into
    # two dense matmul weights and pre-shift / zero-pad the inputs so every kernel-side
    # block is a fully in-bounds, 128-aligned dense tile.
    def fit_len(a):
        cur = a.shape[-1]
        if cur < l_pad:
            a = jnp.pad(a, ((0, 0), (0, 0), (0, l_pad - cur)))
        elif cur > l_pad:
            a = a[:, :, :l_pad]
        return a.astype(cdt)

    x0 = fit_len(x)                          # x[n, c, t]
    x1 = fit_len(x[:, :, dilation:])         # x[n, c, t + dilation]
    w0 = weight[:, :, 0].astype(cdt)         # (C_out, C_in)
    w1 = weight[:, :, 1].astype(cdt)         # (C_out, C_in)
    b2d = bias.reshape(c_out, 1).astype(jnp.float32)

    flops = 2 * 2 * n * c_out * c_in * l_out
    bytes_accessed = (
        (2 * n * c_in * l_pad + 2 * c_out * c_in) * cdt.itemsize
        + n * c_out * l_pad * jnp.dtype(out_dtype).itemsize
        + c_out * 4)

    out_padded = pl.pallas_call(
        _dcconv1d_kernel,
        out_shape=jax.ShapeDtypeStruct((n, c_out, l_pad), out_dtype),
        grid_spec=pltpu.PrefetchScalarGridSpec(
            num_scalar_prefetch=0,
            grid=(n, n_co, n_l),
            in_specs=[
                pl.BlockSpec((1, c_in, tl), lambda b, co, l: (b, 0, l)),
                pl.BlockSpec((1, c_in, tl), lambda b, co, l: (b, 0, l)),
                pl.BlockSpec((tco, c_in), lambda b, co, l: (co, 0)),
                pl.BlockSpec((tco, c_in), lambda b, co, l: (co, 0)),
                pl.BlockSpec((tco, 1), lambda b, co, l: (co, 0)),
            ],
            out_specs=pl.BlockSpec((1, tco, tl), lambda b, co, l: (b, co, l)),
        ),
        compiler_params=pltpu.CompilerParams(
            dimension_semantics=("parallel", "parallel", "parallel"),
            vmem_limit_bytes=32 * 1024 * 1024),
        cost_estimate=pl.CostEstimate(
            flops=int(flops), transcendentals=0,
            bytes_accessed=int(bytes_accessed)),
    )(x0, x1, w0, w1, b2d)

    return out_padded[:, :, :l_out]


def dcconv1d_ref(x, weight, bias, dilation):
    """Pure-JAX reference (same math as torch.nn.Conv1d k=2, dilation=d, pad=0)."""
    l_out = x.shape[-1] - dilation
    xa = x[:, :, :l_out]
    xb = x[:, :, dilation:dilation + l_out]
    return (jnp.einsum("oc,ncl->nol", weight[:, :, 0], xa)
            + jnp.einsum("oc,ncl->nol", weight[:, :, 1], xb)
            + bias[None, :, None])


if __name__ == "__main__":
    key = jax.random.PRNGKey(0)

    def run_case(batch, c_in, c_out, seq_len, dilation, k):
        kx, kw, kb = jax.random.split(k, 3)
        x = jax.random.normal(kx, (batch, c_in, seq_len), dtype=jnp.float32)
        w = jax.random.normal(kw, (c_out, c_in, 2), dtype=jnp.float32) * 0.1
        b = jax.random.normal(kb, (c_out,), dtype=jnp.float32) * 0.1
        out = jax.block_until_ready(dcconv1d(x, w, b, dilation))
        ref = dcconv1d_ref(x, w, b, dilation)
        assert out.shape == (batch, c_out, seq_len - dilation), out.shape
        assert jnp.allclose(out, ref, atol=1e-4, rtol=1e-4), "mismatch vs reference"

    k1, k2 = jax.random.split(key)
    # Small shapes matching the module's toy usage.
    run_case(batch=2, c_in=4, c_out=8, seq_len=16, dilation=2, k=k1)
    # Larger case exercising L tiling, C_out tiling and the padded tail.
    run_case(batch=2, c_in=16, c_out=256, seq_len=3000, dilation=8, k=k2)

    print("KERNEL_OK")
</pallas_src>

<mosaic_0001>
module attributes {stable_mosaic.version = 11 : i64} {
  func.func @_dcconv1d_kernel(%arg0: i32, %arg1: i32, %arg2: i32, %arg3: memref<1x4x128xf32, #tpu.memory_space<vmem>>, %arg4: memref<1x4x128xf32, #tpu.memory_space<vmem>>, %arg5: memref<8x4xf32, #tpu.memory_space<vmem>>, %arg6: memref<8x4xf32, #tpu.memory_space<vmem>>, %arg7: memref<8x1xf32, #tpu.memory_space<vmem>>, %arg8: memref<1x8x128xf32, #tpu.memory_space<vmem>>) attributes {dimension_semantics = [#tpu.dimension_semantics<parallel>, #tpu.dimension_semantics<parallel>, #tpu.dimension_semantics<parallel>], iteration_bounds = array<i64: 2, 1, 1>, scalar_prefetch = 0 : i64, scratch_operands = 0 : i64, tpu.core_type = #tpu.core_type<tc>, window_params = [{transform_indices = @transform_0, window_bounds = array<i64: 1, 4, 128>}, {transform_indices = @transform_1, window_bounds = array<i64: 1, 4, 128>}, {transform_indices = @transform_2, window_bounds = array<i64: 8, 4>}, {transform_indices = @transform_3, window_bounds = array<i64: 8, 4>}, {transform_indices = @transform_4, window_bounds = array<i64: 8, 1>}, {transform_indices = @transform_5, window_bounds = array<i64: 1, 8, 128>}]} {
    %c0 = arith.constant 0 : index
    %c0_0 = arith.constant 0 : index
    %0 = vector.load %arg5[%c0, %c0_0] : memref<8x4xf32, #tpu.memory_space<vmem>>, vector<8x4xf32>
    %c0_1 = arith.constant 0 : index
    %c0_2 = arith.constant 0 : index
    %c0_3 = arith.constant 0 : index
    %1 = vector.load %arg3[%c0_1, %c0_2, %c0_3] : memref<1x4x128xf32, #tpu.memory_space<vmem>>, vector<1x4x128xf32>
    %2 = vector.shape_cast %1 : vector<1x4x128xf32> to vector<4x128xf32>
    %cst = arith.constant dense<0.000000e+00> : vector<8x128xf32>
    %3 = tpu.matmul %0, %2, %cst {dimension_numbers = #tpu.dot_dimension_numbers<[1], [0], [0], [1], [0, 0, 1, 1], [], []>} : vector<8x4xf32>, vector<4x128xf32>, vector<8x128xf32> -> vector<8x128xf32>
    %c0_4 = arith.constant 0 : index
    %c0_5 = arith.constant 0 : index
    %4 = vector.load %arg6[%c0_4, %c0_5] : memref<8x4xf32, #tpu.memory_space<vmem>>, vector<8x4xf32>
    %c0_6 = arith.constant 0 : index
    %c0_7 = arith.constant 0 : index
    %c0_8 = arith.constant 0 : index
    %5 = vector.load %arg4[%c0_6, %c0_7, %c0_8] : memref<1x4x128xf32, #tpu.memory_space<vmem>>, vector<1x4x128xf32>
    %6 = vector.shape_cast %5 : vector<1x4x128xf32> to vector<4x128xf32>
    %cst_9 = arith.constant dense<0.000000e+00> : vector<8x128xf32>
    %7 = tpu.matmul %4, %6, %cst_9 {dimension_numbers = #tpu.dot_dimension_numbers<[1], [0], [0], [1], [0, 0, 1, 1], [], []>} : vector<8x4xf32>, vector<4x128xf32>, vector<8x128xf32> -> vector<8x128xf32>
    %8 = arith.addf %3, %7 : vector<8x128xf32>
    %c0_10 = arith.constant 0 : index
    %c0_11 = arith.constant 0 : index
    %9 = vector.load %arg7[%c0_10, %c0_11] : memref<8x1xf32, #tpu.memory_space<vmem>>, vector<8x1xf32>
    %10 = vector.broadcast %9 : vector<8x1xf32> to vector<8x128xf32>
    %11 = arith.addf %8, %10 : vector<8x128xf32>
    %c0_12 = arith.constant 0 : index
    %c0_13 = arith.constant 0 : index
    %c0_14 = arith.constant 0 : index
    %12 = vector.load %arg8[%c0_12, %c0_13, %c0_14] : memref<1x8x128xf32, #tpu.memory_space<vmem>>, vector<1x8x128xf32>
    %13 = vector.shape_cast %12 : vector<1x8x128xf32> to vector<8x128xf32>
    %14 = vector.shape_cast %11 : vector<8x128xf32> to vector<1x8x128xf32>
    tpu.vector_store %arg8[%c0_12, %c0_13, %c0_14], %14 {strides = array<i32>} : memref<1x8x128xf32, #tpu.memory_space<vmem>>, vector<1x8x128xf32>,
    return
  }
  func.func @transform_0(%arg0: i32, %arg1: i32, %arg2: i32) -> (i32, i32, i32) {
    %c0_i32 = arith.constant 0 : i32
    %c0_i32_0 = arith.constant 0 : i32
    return %arg0, %c0_i32, %arg2 : i32, i32, i32
  }
  func.func @transform_1(%arg0: i32, %arg1: i32, %arg2: i32) -> (i32, i32, i32) {
    %c0_i32 = arith.constant 0 : i32
    %c0_i32_0 = arith.constant 0 : i32
    return %arg0, %c0_i32, %arg2 : i32, i32, i32
  }
  func.func @transform_2(%arg0: i32, %arg1: i32, %arg2: i32) -> (i32, i32) {
    %c0_i32 = arith.constant 0 : i32
    %c0_i32_0 = arith.constant 0 : i32
    return %arg1, %c0_i32 : i32, i32
  }
  func.func @transform_3(%arg0: i32, %arg1: i32, %arg2: i32) -> (i32, i32) {
    %c0_i32 = arith.constant 0 : i32
    %c0_i32_0 = arith.constant 0 : i32
    return %arg1, %c0_i32 : i32, i32
  }
  func.func @transform_4(%arg0: i32, %arg1: i32, %arg2: i32) -> (i32, i32) {
    %c0_i32 = arith.constant 0 : i32
    %c0_i32_0 = arith.constant 0 : i32
    return %arg1, %c0_i32 : i32, i32
  }
  func.func @transform_5(%arg0: i32, %arg1: i32, %arg2: i32) -> (i32, i32, i32) {
    %c0_i32 = arith.constant 0 : i32
    return %arg0, %arg1, %arg2 : i32, i32, i32
  }
}

</mosaic_0001>

<llo_original>
// kernel: tpu_custom_call.1
$region0: #{tpu_custom_call.1}
  #allocation0 [shape = 'u32[]', space=smem, size = 0x4, offset = 0x4, fixed_abs, tag = 'smem constant byte address 0x4 - core index']
  #allocation1 [shape = 'u32[72,128]{1,0:T(1,128)}', space=vmem, size = 0x9000, scoped, tag = 'internal scratch']
  %s0 = inlined_call_operand.vmem [shape: f32[2,4,128], index: 0, kind: input, shape index: {}]
  %s1 = inlined_call_operand.vmem [shape: f32[2,4,128], index: 1, kind: input, shape index: {}]
  %s2 = inlined_call_operand.vmem [shape: f32[8,4], index: 2, kind: input, shape index: {}]
  %s3 = inlined_call_operand.vmem [shape: f32[8,4], index: 3, kind: input, shape index: {}]
  %s4 = inlined_call_operand.vmem [shape: f32[8,1], index: 4, kind: input, shape index: {}]
  %s5 = inlined_call_operand.hbm [shape: f32[2,8,128], index: 5, kind: output, shape index: {}]
  %s6 = sld [smem:[#allocation0]]
  $region53: #{tpu_custom_call.1} parent=0
    _
  %s8 = ssub.s32 1, %s6
  %s9 = scalar_select 0, %s8, %s6
  $region1: #{tpu_custom_call.1} parent=0
    #allocation2 [shape = 'u8[8192]{0}', space=vmem, size = 0x2000, scoped, tag = 'output window, operand 0']
    #allocation3 [shape = 's32[2]{0}', space=sflag, size = 0x8, scoped, tag = 'scoped memory for tpu_custom_call.1']
    %10 = vsyncpa [#allocation3], 0
    %s11 = scalar_lea.sflag [#allocation3], 1
    %12 = vsyncpa %s11, 0
    loop: start=0, step=1, limit=4
    $region2: #{tpu_custom_call.1} parent=1 // loop_pre_header
      _
    $region3: #{tpu_custom_call.1} parent=1 // loop_header
      %s14 = sphi 0, %s18
      %p15 = scmp.ge.s32.totalorder %s14, 4
      %s21 = sphi 0, %s40
      %s22 = sphi 0, %s36
      %s23 = sphi 0, %s32
      %s24 = sphi 0, %s21
      %s25 = sphi 0, %s22
      %s26 = sphi 0, %s23
      %s27 = sphi 0, %s24
      %s28 = sphi 0, %s25
      %s29 = sphi 0, %s26
      %s45 = sphi 0, %s47
      %s48 = sphi 0, %s45
      %s49 = sphi 0, %s48
      %s65 = sphi 0, %s49
      %s73 = sphi 0, %s75
      %s76 = sphi 0, %s73
      %s77 = sphi 0, %s76
      %s93 = sphi 0, %s77
      %s99 = sphi 0, %s101
      %s102 = sphi 0, %s99
      %s103 = sphi 0, %s102
      %s119 = sphi 0, %s103
      %s125 = sphi 0, %s127
      %s128 = sphi 0, %s125
      %s129 = sphi 0, %s128
      %s145 = sphi 0, %s129
      %s151 = sphi 0, %s153
      %s154 = sphi 0, %s151
      %s155 = sphi 0, %s154
      %s171 = sphi 0, %s155
      %s181 = sphi 0, %s183
      %s184 = sphi 0, %s181
      %s185 = sphi 0, %s184
      %s201 = sphi 0, %s185
    $region4: #{tpu_custom_call.1} parent=1 // loop_header_branch
      %17 = sbr.rel (%p15) target = $region8
    $region5: #{tpu_custom_call.1} parent=1 // loop_body
      %s19 = ssub.s32 %s14, 1
      %s20 = ssub.s32 %s14, 2
      %s30 = sadd.s32 1, %s23
      %p31 = scmp.ge.s32.totalorder %s30, 1
      %s32 = scalar_select %p31, 0, %s30
      %s33 = sadd.s32 1, %s22
      %s34 = scalar_select %p31, %s33, %s22
      %p35 = scmp.ge.s32.totalorder %s34, 1
      %s36 = scalar_select %p35, 0, %s34
      %s37 = sadd.s32 1, %s21
      %s38 = scalar_select %p35, %s37, %s21
      %p39 = scmp.ge.s32.totalorder %s38, 2
      %s40 = scalar_select %p39, 0, %s38
      %s41 = ssub.s32 %s21, %s40
      %s42 = ssub.s32 %s23, %s32
      %s43 = sor.u32 %s41, %s42
      %p44 = scmp.eq.s32.totalorder %s43, 0
      %s46 = sadd.s32 %s45, 1
      %s47 = scalar_select %p44, %s45, %s46
      %p50 = pneg %p44
      %p51 = scmp.eq.s32.totalorder %s14, 1
      %p52 = por %p50, %p51
      %p53 = scmp.ne.s32.totalorder %s45, %s48
      %p54 = scmp.eq.s32.totalorder %s14, 0
      %p55 = por %p53, %p54
      %p56 = scmp.ne.s32.totalorder %s45, %s48
      %p57 = scmp.eq.s32.totalorder %s19, 1
      %p58 = por %p56, %p57
      %p59 = scmp.ne.s32.totalorder %s48, %s49
      %p60 = scmp.eq.s32.totalorder %s19, 0
      %p61 = por %p59, %p60
      %p62 = scmp.ne.s32.totalorder %s48, %s49
      %p63 = scmp.eq.s32.totalorder %s20, 1
      %p64 = por %p62, %p63
      %p66 = scmp.ne.s32.totalorder %s49, %s65
      %p67 = scmp.eq.s32.totalorder %s20, 0
      %p68 = por %p66, %p67
      %s69 = ssub.s32 %s21, %s40
      %s70 = ssub.s32 %s23, %s32
      %s71 = sor.u32 %s69, %s70
      %p72 = scmp.eq.s32.totalorder %s71, 0
      %s74 = sadd.s32 %s73, 1
      %s75 = scalar_select %p72, %s73, %s74
      %p78 = pneg %p72
      %p79 = scmp.eq.s32.totalorder %s14, 1
      %p80 = por %p78, %p79
      %p81 = scmp.ne.s32.totalorder %s73, %s76
      %p82 = scmp.eq.s32.totalorder %s14, 0
      %p83 = por %p81, %p82
      %p84 = scmp.ne.s32.totalorder %s73, %s76
      %p85 = scmp.eq.s32.totalorder %s19, 1
      %p86 = por %p84, %p85
      %p87 = scmp.ne.s32.totalorder %s76, %s77
      %p88 = scmp.eq.s32.totalorder %s19, 0
      %p89 = por %p87, %p88
      %p90 = scmp.ne.s32.totalorder %s76, %s77
      %p91 = scmp.eq.s32.totalorder %s20, 1
      %p92 = por %p90, %p91
      %p94 = scmp.ne.s32.totalorder %s77, %s93
      %p95 = scmp.eq.s32.totalorder %s20, 0
      %p96 = por %p94, %p95
      %s97 = ssub.s32 %s22, %s36
      %p98 = scmp.eq.s32.totalorder %s97, 0
      %s100 = sadd.s32 %s99, 1
      %s101 = scalar_select %p98, %s99, %s100
      %p104 = pneg %p98
      %p105 = scmp.eq.s32.totalorder %s14, 1
      %p106 = por %p104, %p105
      %p107 = scmp.ne.s32.totalorder %s99, %s102
      %p108 = scmp.eq.s32.totalorder %s14, 0
      %p109 = por %p107, %p108
      %p110 = scmp.ne.s32.totalorder %s99, %s102
      %p111 = scmp.eq.s32.totalorder %s19, 1
      %p112 = por %p110, %p111
      %p113 = scmp.ne.s32.totalorder %s102, %s103
      %p114 = scmp.eq.s32.totalorder %s19, 0
      %p115 = por %p113, %p114
      %p116 = scmp.ne.s32.totalorder %s102, %s103
      %p117 = scmp.eq.s32.totalorder %s20, 1
      %p118 = por %p116, %p117
      %p120 = scmp.ne.s32.totalorder %s103, %s119
      %p121 = scmp.eq.s32.totalorder %s20, 0
      %p122 = por %p120, %p121
      %s123 = ssub.s32 %s22, %s36
      %p124 = scmp.eq.s32.totalorder %s123, 0
      %s126 = sadd.s32 %s125, 1
      %s127 = scalar_select %p124, %s125, %s126
      %p130 = pneg %p124
      %p131 = scmp.eq.s32.totalorder %s14, 1
      %p132 = por %p130, %p131
      %p133 = scmp.ne.s32.totalorder %s125, %s128
      %p134 = scmp.eq.s32.totalorder %s14, 0
      %p135 = por %p133, %p134
      %p136 = scmp.ne.s32.totalorder %s125, %s128
      %p137 = scmp.eq.s32.totalorder %s19, 1
      %p138 = por %p136, %p137
      %p139 = scmp.ne.s32.totalorder %s128, %s129
      %p140 = scmp.eq.s32.totalorder %s19, 0
      %p141 = por %p139, %p140
      %p142 = scmp.ne.s32.totalorder %s128, %s129
      %p143 = scmp.eq.s32.totalorder %s20, 1
      %p144 = por %p142, %p143
      %p146 = scmp.ne.s32.totalorder %s129, %s145
      %p147 = scmp.eq.s32.totalorder %s20, 0
      %p148 = por %p146, %p147
      %s149 = ssub.s32 %s22, %s36
      %p150 = scmp.eq.s32.totalorder %s149, 0
      %s152 = sadd.s32 %s151, 1
      %s153 = scalar_select %p150, %s151, %s152
      %p156 = pneg %p150
      %p157 = scmp.eq.s32.totalorder %s14, 1
      %p158 = por %p156, %p157
      %p159 = scmp.ne.s32.totalorder %s151, %s154
      %p160 = scmp.eq.s32.totalorder %s14, 0
      %p161 = por %p159, %p160
      %p162 = scmp.ne.s32.totalorder %s151, %s154
      %p163 = scmp.eq.s32.totalorder %s19, 1
      %p164 = por %p162, %p163
      %p165 = scmp.ne.s32.totalorder %s154, %s155
      %p166 = scmp.eq.s32.totalorder %s19, 0
      %p167 = por %p165, %p166
      %p168 = scmp.ne.s32.totalorder %s154, %s155
      %p169 = scmp.eq.s32.totalorder %s20, 1
      %p170 = por %p168, %p169
      %p172 = scmp.ne.s32.totalorder %s155, %s171
      %p173 = scmp.eq.s32.totalorder %s20, 0
      %p174 = por %p172, %p173
      %s175 = ssub.s32 %s21, %s40
      %s176 = ssub.s32 %s22, %s36
      %s177 = sor.u32 %s175, %s176
      %s178 = ssub.s32 %s23, %s32
      %s179 = sor.u32 %s177, %s178
      %p180 = scmp.eq.s32.totalorder %s179, 0
      %s182 = sadd.s32 %s181, 1
      %s183 = scalar_select %p180, %s181, %s182
      %p186 = pneg %p180
      %p187 = scmp.eq.s32.totalorder %s14, 1
      %p188 = por %p186, %p187
      %p189 = scmp.ne.s32.totalorder %s181, %s184
      %p190 = scmp.eq.s32.totalorder %s14, 0
      %p191 = por %p189, %p190
      %p192 = scmp.ne.s32.totalorder %s181, %s184
      %p193 = scmp.eq.s32.totalorder %s19, 1
      %p194 = por %p192, %p193
      %p195 = scmp.ne.s32.totalorder %s184, %s185
      %p196 = scmp.eq.s32.totalorder %s19, 0
      %p197 = por %p195, %p196
      %p198 = scmp.ne.s32.totalorder %s184, %s185
      %p199 = scmp.eq.s32.totalorder %s20, 1
      %p200 = por %p198, %p199
      %p202 = scmp.ne.s32.totalorder %s185, %s201
      %p203 = scmp.eq.s32.totalorder %s20, 0
      %p204 = por %p202, %p203
      %p205 = scmp.le.s32.totalorder 1, %s14
      %p206 = scmp.lt.s32.totalorder %s14, 3
      %p207 = pnand %p205, %p206
      %p208 = pneg %p207
      // Predicated region
      $region9: #{tpu_custom_call.1} parent=5 // pred_check
        _
      $region10: #{tpu_custom_call.1} parent=5 // pred_check_branch
        %210 = sbr.rel (%p207) target = $region12
      $region11: #{tpu_custom_call.1} parent=5 // pred_region
        %s211 = ssub.s32 %s14, 1
        // Predicated region
        $region13: #{tpu_custom_call.1} parent=11 // pred_check
          %p212 = pneg %p115
        $region14: #{tpu_custom_call.1} parent=11 // pred_check_branch
          %214 = sbr.rel (%p212) target = $region16
        $region15: #{tpu_custom_call.1} parent=11 // pred_region
          %p215 = scmp.lt.s32.totalorder %s25, 0
          %s216 = scalar_select %p215, %s25, 0
          %s217 = smul.addr %s216, 8
          %s218 = scalar_lea.vmem %s2, %s217
        $region16: #{tpu_custom_call.1} parent=11 // pred_fallthru
          _
        // Predicated region
        $region17: #{tpu_custom_call.1} parent=11 // pred_check
          %p219 = pneg %p141
        $region18: #{tpu_custom_call.1} parent=11 // pred_check_branch
          %221 = sbr.rel (%p219) target = $region20
        $region19: #{tpu_custom_call.1} parent=11 // pred_region
          %p222 = scmp.lt.s32.totalorder %s25, 0
          %s223 = scalar_select %p222, %s25, 0
          %s224 = smul.addr %s223, 8
          %s225 = scalar_lea.vmem %s3, %s224
        $region20: #{tpu_custom_call.1} parent=11 // pred_fallthru
          _
        // Predicated region
        $region21: #{tpu_custom_call.1} parent=11 // pred_check
          %p226 = pneg %p167
        $region22: #{tpu_custom_call.1} parent=11 // pred_check_branch
          %228 = sbr.rel (%p226) target = $region24
        $region23: #{tpu_custom_call.1} parent=11 // pred_region
          %p229 = scmp.lt.s32.totalorder %s25, 0
          %s230 = scalar_select %p229, %s25, 0
          %s231 = smul.addr %s230, 8
          %s232 = scalar_lea.vmem %s4, %s231
        $region24: #{tpu_custom_call.1} parent=11 // pred_fallthru
          _
      $region12: #{tpu_custom_call.1} parent=5 // pred_fallthru
        _
      %p233 = scmp.lt.s32.totalorder %s14, 2
      // Predicated region
      $region25: #{tpu_custom_call.1} parent=5 // pred_check
        %p234 = pneg %p233
      $region26: #{tpu_custom_call.1} parent=5 // pred_check_branch
        %236 = sbr.rel (%p234) target = $region28
      $region27: #{tpu_custom_call.1} parent=5 // pred_region
        // Predicated region
        $region29: #{tpu_custom_call.1} parent=27 // pred_check
          %p237 = pneg %p55
        $region30: #{tpu_custom_call.1} parent=27 // pred_check_branch
          %239 = sbr.rel (%p237) target = $region32
        $region31: #{tpu_custom_call.1} parent=27 // pred_region
          %p240 = scmp.lt.s32.totalorder %s21, 1
          %s241 = scalar_select %p240, %s21, 1
          %p242 = scmp.lt.s32.totalorder %s23, 0
          %s243 = scalar_select %p242, %s23, 0
          %s244 = sadd.s32 %s243, %s241
          %s245 = smul.addr %s244, 4
          %s246 = scalar_lea.vmem %s0, %s245
        $region32: #{tpu_custom_call.1} parent=27 // pred_fallthru
          _
        // Predicated region
        $region33: #{tpu_custom_call.1} parent=27 // pred_check
          %p247 = pneg %p83
        $region34: #{tpu_custom_call.1} parent=27 // pred_check_branch
          %249 = sbr.rel (%p247) target = $region36
        $region35: #{tpu_custom_call.1} parent=27 // pred_region
          %p250 = scmp.lt.s32.totalorder %s21, 1
          %s251 = scalar_select %p250, %s21, 1
          %p252 = scmp.lt.s32.totalorder %s23, 0
          %s253 = scalar_select %p252, %s23, 0
          %s254 = sadd.s32 %s253, %s251
          %s255 = smul.addr %s254, 4
          %s256 = scalar_lea.vmem %s1, %s255
        $region36: #{tpu_custom_call.1} parent=27 // pred_fallthru
          _
      $region28: #{tpu_custom_call.1} parent=5 // pred_fallthru
        _
      %p257 = scmp.le.s32.totalorder 1, %s14
      %p258 = scmp.lt.s32.totalorder %s14, 3
      %p259 = pnand %p257, %p258
      %p260 = pneg %p259
      // Predicated region
      $region37: #{tpu_custom_call.1} parent=5 // pred_check
        _
      $region38: #{tpu_custom_call.1} parent=5 // pred_check_branch
        %262 = sbr.rel (%p259) target = $region40
      $region39: #{tpu_custom_call.1} parent=5 // pred_region
        %s263 = ssub.s32 %s14, 1
        %p264 = scmp.lt.s32.totalorder %s24, 1
        %s265 = scalar_select %p264, %s24, 1
        %p266 = scmp.lt.s32.totalorder %s26, 0
        %s267 = scalar_select %p266, %s26, 0
        %s268 = sadd.s32 %s267, %s265
        %s269 = smul.addr %s268, 4
        %s270 = scalar_lea.vmem %s0, %s269
        %p271 = pneg %p61
        %p272 = pneg %p58
        %p273 = scmp.lt.s32.totalorder %s24, 1
        %s274 = scalar_select %p273, %s24, 1
        %p275 = scmp.lt.s32.totalorder %s26, 0
        %s276 = scalar_select %p275, %s26, 0
        %s277 = sadd.s32 %s276, %s274
        %s278 = smul.addr %s277, 4
        %s279 = scalar_lea.vmem %s1, %s278
        %p280 = pneg %p89
        %p281 = pneg %p86
        %p282 = scmp.lt.s32.totalorder %s25, 0
        %s283 = scalar_select %p282, %s25, 0
        %s284 = smul.addr %s283, 8
        %s285 = scalar_lea.vmem %s2, %s284
        %p286 = pneg %p115
        %p287 = pneg %p112
        %p288 = scmp.lt.s32.totalorder %s25, 0
        %s289 = scalar_select %p288, %s25, 0
        %s290 = smul.addr %s289, 8
        %s291 = scalar_lea.vmem %s3, %s290
        %p292 = pneg %p141
        %p293 = pneg %p138
        %p294 = scmp.lt.s32.totalorder %s25, 0
        %s295 = scalar_select %p294, %s25, 0
        %s296 = smul.addr %s295, 8
        %s297 = scalar_lea.vmem %s4, %s296
        %p298 = pneg %p167
        %p299 = pneg %p164
        %p300 = pneg %p197
        %p301 = pneg %p194
        %s302 = sand.u32 %s184, 1
        %s303 = scalar_lea.sflag [#allocation3], %s302
        %s304 = sand.u32 %s184, 1
        %s305 = smul.addr %s304, 8
        %s306 = scalar_lea.vmem [#allocation2], %s305
        %p307 = scmp.lt.s32.totalorder %s24, 1
        %s308 = scalar_select %p307, %s24, 1
        %p309 = scmp.lt.s32.totalorder %s26, 0
        %s310 = scalar_select %p309, %s26, 0
        %s311 = sadd.s32 %s310, %s308
        %s312 = smul.addr %s311, 4
        %s313 = scalar_lea.vmem %s0, %s312
        %p314 = scmp.lt.s32.totalorder %s24, 1
        %s315 = scalar_select %p314, %s24, 1
        %p316 = scmp.lt.s32.totalorder %s26, 0
        %s317 = scalar_select %p316, %s26, 0
        %s318 = sadd.s32 %s317, %s315
        %s319 = smul.addr %s318, 4
        %s320 = scalar_lea.vmem %s1, %s319
        %p321 = scmp.lt.s32.totalorder %s25, 0
        %s322 = scalar_select %p321, %s25, 0
        %s323 = smul.addr %s322, 8
        %s324 = scalar_lea.vmem %s2, %s323
        %p325 = scmp.lt.s32.totalorder %s25, 0
        %s326 = scalar_select %p325, %s25, 0
        %s327 = smul.addr %s326, 8
        %s328 = scalar_lea.vmem %s3, %s327
        %p329 = scmp.lt.s32.totalorder %s25, 0
        %s330 = scalar_select %p329, %s25, 0
        %s331 = smul.addr %s330, 8
        %s332 = scalar_lea.vmem %s4, %s331
        %v333 = vld [vmem:[%s324] sm:$0xff]
        %v334 = vld [vmem:[%s313] sm:$0xf]
        %v335 = vld [vmem:[%s328] sm:$0xff]
        %v336 = vld [vmem:[%s320] sm:$0xf]
        %vm337 = vcmask 31744
        %v339 = vsel %vm337, %v335, 0
        %vm341 = vcmask 1043456
        %v343 = vsel %vm341, %v336, 0
        %345 = vmatpush.msra.mxu0 0.0
        %346 = vmatpush.msra.mxu0 0.0
        %347 = vmatpush.msra.mxu0 0.0
        %348 = vmatpush.msra.mxu0 0.0
        %349 = vmatpush.msra.mxu0 0.0
        %350 = vmatpush.msra.mxu0 0.0
        %351 = vmatpush.msra.mxu0 0.0
        %352 = vmatpush.msra.mxu0 0.0
        %353 = vmatpush.msra.mxu0 0.0
        %354 = vmatpush.msra.mxu0 0.0
        %355 = vmatpush.msra.mxu0 0.0
        %356 = vmatpush.msra.mxu0 0.0
        %357 = vmatpush.msra.mxu0 0.0
        %358 = vmatpush.msra.mxu0 0.0
        %359 = vmatpush.msra.mxu0 0.0
        %360 = vmatpush.msra.mxu0 %v343
        %361 = vmatmul.f32.gmra.mxu0 %v339
        %v362 = vpop.f32.mrf.mxu0
        %v363 = vadd.f32 0.0, %v362
        %364 = vdwg.mxu0
        %v366 = vsel %vm337, %v333, 0
        %v369 = vsel %vm341, %v334, 0
        %371 = vmatpush.msra.mxu0 0.0
        %372 = vmatpush.msra.mxu0 0.0
        %373 = vmatpush.msra.mxu0 0.0
        %374 = vmatpush.msra.mxu0 0.0
        %375 = vmatpush.msra.mxu0 0.0
        %376 = vmatpush.msra.mxu0 0.0
        %377 = vmatpush.msra.mxu0 0.0
        %378 = vmatpush.msra.mxu0 0.0
        %379 = vmatpush.msra.mxu0 0.0
        %380 = vmatpush.msra.mxu0 0.0
        %381 = vmatpush.msra.mxu0 0.0
        %382 = vmatpush.msra.mxu0 0.0
        %383 = vmatpush.msra.mxu0 0.0
        %384 = vmatpush.msra.mxu0 0.0
        %385 = vmatpush.msra.mxu0 0.0
        %386 = vmatpush.msra.mxu0 %v369
        %387 = vmatmul.f32.gmra.mxu0 %v366
        %v388 = vpop.f32.mrf.mxu0
        %v389 = vadd.f32 %v363, %v388
        %390 = vdwg.mxu0
        %v391 = vld [vmem:[%s332] sm:$0xff]
        %393 = vset.pattern.permute.xlu0 0
        %394 = vperm.xlu0 %393, %v391
        %v395 = vpop.permute.xlu0 %394
        %v397 = vadd.f32 %v389, %v395
        %398 = vst [vmem:[%s306] sm:$0xff] %v397
        %s399 = sand.u32 %s184, 1
        %s400 = scalar_lea.sflag [#allocation3], %s399
        %s401 = sand.u32 %s184, 1
        %s402 = smul.addr %s401, 8
        %s403 = scalar_lea.vmem [#allocation2], %s402
        // Predicated region
        $region41: #{tpu_custom_call.1} parent=39 // pred_check
          %p404 = pneg %p194
        $region42: #{tpu_custom_call.1} parent=39 // pred_check_branch
          %406 = sbr.rel (%p404) target = $region44
        $region43: #{tpu_custom_call.1} parent=39 // pred_region
          %408 = vsyncadd %s400, 0
          %s409 = sadd.s32 %s26, %s25
          %s410 = sadd.s32 %s409, %s24
          %s411 = smul.addr %s410, 8
          %s412 = scalar_lea.hbm %s5, %s411
          %s414 = sshll.u32 %s403, 4
          %s415 = int_to_ptr.vmem [resolvable:$true] %s414
          %s416 = sshll.u32 %s412, 4
          %s417 = int_to_ptr.hbm [resolvable:$true] %s416
          %419 = dma.vmem_to_hbm [thread:$0]  %s415, 128, %s417, %s400
        $region44: #{tpu_custom_call.1} parent=39 // pred_fallthru
          _
      $region40: #{tpu_custom_call.1} parent=5 // pred_fallthru
        _
      %p420 = scmp.le.s32.totalorder 2, %s14
      // Predicated region
      $region45: #{tpu_custom_call.1} parent=5 // pred_check
        %p421 = pneg %p420
      $region46: #{tpu_custom_call.1} parent=5 // pred_check_branch
        %423 = sbr.rel (%p421) target = $region48
      $region47: #{tpu_custom_call.1} parent=5 // pred_region
        %s424 = ssub.s32 %s14, 2
        // Predicated region
        $region49: #{tpu_custom_call.1} parent=47 // pred_check
          %p425 = pneg %p200
        $region50: #{tpu_custom_call.1} parent=47 // pred_check_branch
          %427 = sbr.rel (%p425) target = $region52
        $region51: #{tpu_custom_call.1} parent=47 // pred_region
          %s428 = sand.u32 %s185, 1
          %s429 = scalar_lea.sflag [#allocation3], %s428
          %s430 = sand.u32 %s185, 1
          %s431 = smul.addr %s430, 8
          %s432 = scalar_lea.vmem [#allocation2], %s431
          %434 = dma.done %s429, 128
        $region52: #{tpu_custom_call.1} parent=47 // pred_fallthru
          _
      $region48: #{tpu_custom_call.1} parent=5 // pred_fallthru
        _
    $region6: #{tpu_custom_call.1} parent=1 // loop_footer
      %s18 = sadd.s32 1, %s14
    $region7: #{tpu_custom_call.1} parent=1 // loop_footer_branch
      %13 = sbr.rel target = $region3
    $region8: #{tpu_custom_call.1} parent=1 // loop_exit
      _
    %435 = vsyncpa [#allocation3], 1
    %s436 = scalar_lea.sflag [#allocation3], 1
    %437 = vsyncpa %s436, 1

</llo_original>
